<compile_context>
chip_gen: v5e
topology: v5e:2x2
jax: 0.10.0
libtpu: 0.0.40
codegen_flags: <defaults>
</compile_context>

<pallas_src>
import functools

import jax
import jax.numpy as jnp
from jax.experimental import pallas as pl
from jax.experimental.pallas import tpu as pltpu


# ---------------------------------------------------------------------------
# Pallas kernel: Kt shifted matmuls + bias + residual + activation, per batch
# ---------------------------------------------------------------------------
def _temporal_conv_kernel(x_ref, w_ref, b_ref, o_ref, *,
                          Kt, V, T_out, c_in, c_out, act_func):
    # x_ref: (1, c_in, T*V)       one batch element, time-vertex flattened on lanes
    # w_ref: (Kt, c_conv, c_in)   conv weight, one (c_conv, c_in) matrix per tap
    # b_ref: (c_conv, 1)          conv bias (broadcast over lanes)
    # o_ref: (1, c_out, T_out*V)  lane-dense output
    N = T_out * V
    x = x_ref[0]                                    # (c_in, T*V)

    # causal (Kt,1) VALID conv as Kt shifted windows of the flattened (t, v) axis
    conv = jnp.dot(w_ref[0], x[:, 0:N],
                   preferred_element_type=jnp.float32)          # (c_conv, N)
    for kt in range(1, Kt):                                      # static unroll
        conv = conv + jnp.dot(w_ref[kt], x[:, kt * V:kt * V + N],
                              preferred_element_type=jnp.float32)
    conv = conv + b_ref[...]                                     # (c_conv,1) bcast

    # Align(c_in <= c_out) + temporal crop x[:, :, Kt-1:, :], built in-kernel
    x_res = x[:, (Kt - 1) * V:(Kt - 1) * V + N]                  # (c_in, N)
    if c_in < c_out:
        x_in = jnp.concatenate(
            [x_res, jnp.zeros((c_out - c_in, N), x_res.dtype)], axis=0)
    else:  # c_in == c_out
        x_in = x_res

    if act_func in ("glu", "gtu"):
        x_p = conv[:c_out]          # sublane-range views (c_conv == 2*c_out)
        x_q = conv[c_out:]
        gate = jax.nn.sigmoid(x_q)
        if act_func == "glu":
            out = (x_p + x_in) * gate
        else:  # gtu
            out = jnp.tanh(x_p + x_in) * gate
    elif act_func == "relu":
        out = jnp.maximum(conv + x_in, 0.0)
    elif act_func == "silu":
        z = conv + x_in
        out = z * jax.nn.sigmoid(z)
    else:
        raise NotImplementedError(f"activation {act_func} not implemented")

    o_ref[0] = out.astype(o_ref.dtype)


# ---------------------------------------------------------------------------
# Wrapper: only free reshapes / tiny weight transpose outside the kernel
# ---------------------------------------------------------------------------
def temporal_conv_layer(x, conv_weight, conv_bias, *, Kt, c_in, c_out, act_func):
    """x: (B, c_in, T, V) float32 -> (B, c_out, T-Kt+1, V) float32."""
    B, _, T, V = x.shape
    T_out = T - Kt + 1
    c_conv = conv_weight.shape[0]      # 2*c_out for glu/gtu, else c_out

    if c_in > c_out:
        # TODO(synk): Align's learned 1x1 conv branch (c_in > c_out) not exercised here.
        raise NotImplementedError("c_in > c_out align-conv branch not implemented")

    # free reshape: NCHW -> (B, c_in, T*V); (t, v) flattened with v fastest
    x_flat = x.reshape(B, c_in, T * V)
    # weight (c_conv, c_in, Kt) -> (Kt, c_conv, c_in): one small matrix per tap
    w_kt = jnp.transpose(conv_weight, (2, 0, 1))
    b_col = conv_bias.reshape(c_conv, 1)

    kernel = functools.partial(_temporal_conv_kernel, Kt=Kt, V=V, T_out=T_out,
                               c_in=c_in, c_out=c_out, act_func=act_func)

    out_flat = pl.pallas_call(
        kernel,
        out_shape=jax.ShapeDtypeStruct((B, c_out, T_out * V), jnp.float32),
        grid_spec=pltpu.PrefetchScalarGridSpec(
            num_scalar_prefetch=0,
            grid=(B,),
            in_specs=[
                pl.BlockSpec((1, c_in, T * V), lambda b: (b, 0, 0)),
                pl.BlockSpec((Kt, c_conv, c_in), lambda b: (0, 0, 0)),
                pl.BlockSpec((c_conv, 1), lambda b: (0, 0)),
            ],
            out_specs=pl.BlockSpec((1, c_out, T_out * V), lambda b: (b, 0, 0)),
        ),
        compiler_params=pltpu.CompilerParams(dimension_semantics=("parallel",)),
    )(x_flat, w_kt, b_col)

    # free reshape back to NCHW: (B, c_out, T_out*V) -> (B, c_out, T_out, V)
    return out_flat.reshape(B, c_out, T_out, V)


# ---------------------------------------------------------------------------
# Pure-JAX reference (mirrors the PyTorch forward) for validation
# ---------------------------------------------------------------------------
def temporal_conv_layer_ref(x, conv_weight, conv_bias, *, Kt, c_in, c_out, act_func):
    B, _, T, V = x.shape
    T_out = T - Kt + 1
    conv = jnp.zeros((B, conv_weight.shape[0], T_out, V), jnp.float32)
    for kt in range(Kt):
        conv = conv + jnp.einsum(
            "oi,bitv->botv", conv_weight[:, :, kt], x[:, :, kt:kt + T_out, :])
    conv = conv + conv_bias[None, :, None, None]
    if c_in < c_out:
        x_al = jnp.concatenate(
            [x, jnp.zeros((B, c_out - c_in, T, V), x.dtype)], axis=1)
    else:
        x_al = x
    x_in = x_al[:, :, Kt - 1:, :]
    if act_func in ("glu", "gtu"):
        x_p = conv[:, :c_out]
        x_q = conv[:, -c_out:]
        if act_func == "glu":
            return (x_p + x_in) * jax.nn.sigmoid(x_q)
        return jnp.tanh(x_p + x_in) * jax.nn.sigmoid(x_q)
    if act_func == "relu":
        return jnp.maximum(conv + x_in, 0.0)
    if act_func == "silu":
        z = conv + x_in
        return z * jax.nn.sigmoid(z)
    raise NotImplementedError(act_func)


if __name__ == "__main__":
    # Module hyper-parameters (small, consistent with the PyTorch forward)
    Kt, c_in, c_out, n_vertex = 3, 4, 8, 16
    act_func = "glu"                 # causal conv has 2*c_out output channels
    B, T = 2, 16
    c_conv = 2 * c_out

    key = jax.random.PRNGKey(0)
    kx, kw, kb = jax.random.split(key, 3)

    x = jax.random.normal(kx, (B, c_in, T, n_vertex), dtype=jnp.float32)
    # conv params: weight (2*c_out, c_in, Kt), bias (2*c_out,)
    conv_weight = 0.1 * jax.random.normal(kw, (c_conv, c_in, Kt), dtype=jnp.float32)
    conv_bias = 0.1 * jax.random.normal(kb, (c_conv,), dtype=jnp.float32)

    out = temporal_conv_layer(x, conv_weight, conv_bias,
                              Kt=Kt, c_in=c_in, c_out=c_out, act_func=act_func)
    out = jax.block_until_ready(out)

    ref = temporal_conv_layer_ref(x, conv_weight, conv_bias,
                                  Kt=Kt, c_in=c_in, c_out=c_out, act_func=act_func)

    assert out.shape == (B, c_out, T - Kt + 1, n_vertex), out.shape
    # default (not HIGHEST) MXU precision on both sides -> slightly loosened tol
    assert jnp.allclose(out, ref, atol=2e-3, rtol=2e-3), float(
        jnp.max(jnp.abs(out - ref)))

    print("KERNEL_OK")
</pallas_src>

<mosaic_0001>
module attributes {stable_mosaic.version = 11 : i64} {
  func.func @_temporal_conv_kernel(%arg0: i32, %arg1: memref<1x4x256xf32, #tpu.memory_space<vmem>>, %arg2: memref<3x16x4xf32, #tpu.memory_space<vmem>>, %arg3: memref<16x1xf32, #tpu.memory_space<vmem>>, %arg4: memref<1x8x224xf32, #tpu.memory_space<vmem>>) attributes {dimension_semantics = [#tpu.dimension_semantics<parallel>], iteration_bounds = array<i64: 2>, scalar_prefetch = 0 : i64, scratch_operands = 0 : i64, tpu.core_type = #tpu.core_type<tc>, window_params = [{transform_indices = @transform_0, window_bounds = array<i64: 1, 4, 256>}, {pipeline_mode = #tpu.pipeline_mode<synchronous>, transform_indices = @transform_1, window_bounds = array<i64: 3, 16, 4>}, {pipeline_mode = #tpu.pipeline_mode<synchronous>, transform_indices = @transform_2, window_bounds = array<i64: 16, 1>}, {transform_indices = @transform_3, window_bounds = array<i64: 1, 8, 224>}]} {
    %c0 = arith.constant 0 : index
    %c0_0 = arith.constant 0 : index
    %c0_1 = arith.constant 0 : index
    %0 = vector.load %arg1[%c0, %c0_0, %c0_1] : memref<1x4x256xf32, #tpu.memory_space<vmem>>, vector<1x4x256xf32>
    %1 = vector.shape_cast %0 : vector<1x4x256xf32> to vector<4x256xf32>
    %c0_2 = arith.constant 0 : index
    %c0_3 = arith.constant 0 : index
    %c0_4 = arith.constant 0 : index
    %2 = vector.load %arg2[%c0_2, %c0_3, %c0_4] : memref<3x16x4xf32, #tpu.memory_space<vmem>>, vector<1x16x4xf32>
    %3 = vector.shape_cast %2 : vector<1x16x4xf32> to vector<16x4xf32>
    %4 = vector.extract_strided_slice %1 {offsets = [0, 0], sizes = [4, 224], strides = [1, 1]} : vector<4x256xf32> to vector<4x224xf32>
    %cst = arith.constant dense<0.000000e+00> : vector<16x224xf32>
    %5 = tpu.matmul %3, %4, %cst {dimension_numbers = #tpu.dot_dimension_numbers<[1], [0], [0], [1], [0, 0, 1, 1], [], []>} : vector<16x4xf32>, vector<4x224xf32>, vector<16x224xf32> -> vector<16x224xf32>
    %c1 = arith.constant 1 : index
    %c0_5 = arith.constant 0 : index
    %c0_6 = arith.constant 0 : index
    %6 = vector.load %arg2[%c1, %c0_5, %c0_6] : memref<3x16x4xf32, #tpu.memory_space<vmem>>, vector<1x16x4xf32>
    %7 = vector.shape_cast %6 : vector<1x16x4xf32> to vector<16x4xf32>
    %8 = vector.extract_strided_slice %1 {offsets = [0, 16], sizes = [4, 224], strides = [1, 1]} : vector<4x256xf32> to vector<4x224xf32>
    %cst_7 = arith.constant dense<0.000000e+00> : vector<16x224xf32>
    %9 = tpu.matmul %7, %8, %cst_7 {dimension_numbers = #tpu.dot_dimension_numbers<[1], [0], [0], [1], [0, 0, 1, 1], [], []>} : vector<16x4xf32>, vector<4x224xf32>, vector<16x224xf32> -> vector<16x224xf32>
    %10 = arith.addf %5, %9 : vector<16x224xf32>
    %c2 = arith.constant 2 : index
    %c0_8 = arith.constant 0 : index
    %c0_9 = arith.constant 0 : index
    %11 = vector.load %arg2[%c2, %c0_8, %c0_9] : memref<3x16x4xf32, #tpu.memory_space<vmem>>, vector<1x16x4xf32>
    %12 = vector.shape_cast %11 : vector<1x16x4xf32> to vector<16x4xf32>
    %13 = vector.extract_strided_slice %1 {offsets = [0, 32], sizes = [4, 224], strides = [1, 1]} : vector<4x256xf32> to vector<4x224xf32>
    %cst_10 = arith.constant dense<0.000000e+00> : vector<16x224xf32>
    %14 = tpu.matmul %12, %13, %cst_10 {dimension_numbers = #tpu.dot_dimension_numbers<[1], [0], [0], [1], [0, 0, 1, 1], [], []>} : vector<16x4xf32>, vector<4x224xf32>, vector<16x224xf32> -> vector<16x224xf32>
    %15 = arith.addf %10, %14 : vector<16x224xf32>
    %c0_11 = arith.constant 0 : index
    %c0_12 = arith.constant 0 : index
    %16 = vector.load %arg3[%c0_11, %c0_12] : memref<16x1xf32, #tpu.memory_space<vmem>>, vector<16x1xf32>
    %17 = vector.broadcast %16 : vector<16x1xf32> to vector<16x224xf32>
    %18 = arith.addf %15, %17 : vector<16x224xf32>
    %19 = vector.extract_strided_slice %1 {offsets = [0, 32], sizes = [4, 224], strides = [1, 1]} : vector<4x256xf32> to vector<4x224xf32>
    %cst_13 = arith.constant 0.000000e+00 : f32
    %20 = vector.broadcast %cst_13 : f32 to vector<4x224xf32>
    %21 = tpu.concatenate %19, %20 in 0 : vector<4x224xf32>, vector<4x224xf32> -> vector<8x224xf32>
    %22 = vector.extract_strided_slice %18 {offsets = [0, 0], sizes = [8, 224], strides = [1, 1]} : vector<16x224xf32> to vector<8x224xf32>
    %23 = vector.extract_strided_slice %18 {offsets = [8, 0], sizes = [8, 224], strides = [1, 1]} : vector<16x224xf32> to vector<8x224xf32>
    %24 = arith.negf %23 : vector<8x224xf32>
    %25 = math.exp %24 : vector<8x224xf32>
    %cst_14 = arith.constant 1.000000e+00 : f32
    %26 = vector.broadcast %cst_14 : f32 to vector<8x224xf32>
    %27 = arith.addf %26, %25 : vector<8x224xf32>
    %28 = arith.divf %26, %27 : vector<8x224xf32>
    %29 = arith.addf %22, %21 : vector<8x224xf32>
    %30 = arith.mulf %29, %28 : vector<8x224xf32>
    %c0_15 = arith.constant 0 : index
    %c0_16 = arith.constant 0 : index
    %c0_17 = arith.constant 0 : index
    %31 = vector.load %arg4[%c0_15, %c0_16, %c0_17] : memref<1x8x224xf32, #tpu.memory_space<vmem>>, vector<1x8x224xf32>
    %32 = vector.shape_cast %31 : vector<1x8x224xf32> to vector<8x224xf32>
    %33 = vector.shape_cast %30 : vector<8x224xf32> to vector<1x8x224xf32>
    tpu.vector_store %arg4[%c0_15, %c0_16, %c0_17], %33 {strides = array<i32>} : memref<1x8x224xf32, #tpu.memory_space<vmem>>, vector<1x8x224xf32>,
    return
  }
  func.func @transform_0(%arg0: i32) -> (i32, i32, i32) {
    %c0_i32 = arith.constant 0 : i32
    %c0_i32_0 = arith.constant 0 : i32
    %c0_i32_1 = arith.constant 0 : i32
    return %arg0, %c0_i32, %c0_i32_0 : i32, i32, i32
  }
  func.func @transform_1(%arg0: i32) -> (i32, i32, i32) {
    %c0_i32 = arith.constant 0 : i32
    %c0_i32_0 = arith.constant 0 : i32
    %c0_i32_1 = arith.constant 0 : i32
    %c0_i32_2 = arith.constant 0 : i32
    return %c0_i32, %c0_i32_0, %c0_i32_1 : i32, i32, i32
  }
  func.func @transform_2(%arg0: i32) -> (i32, i32) {
    %c0_i32 = arith.constant 0 : i32
    %c0_i32_0 = arith.constant 0 : i32
    %c0_i32_1 = arith.constant 0 : i32
    return %c0_i32, %c0_i32_0 : i32, i32
  }
  func.func @transform_3(%arg0: i32) -> (i32, i32, i32) {
    %c0_i32 = arith.constant 0 : i32
    %c0_i32_0 = arith.constant 0 : i32
    %c0_i32_1 = arith.constant 0 : i32
    return %arg0, %c0_i32, %c0_i32_0 : i32, i32, i32
  }
}

</mosaic_0001>

<llo_original>
// kernel: tpu_custom_call.1
$region0: #{tpu_custom_call.1}
  #allocation0 [shape = 'u32[]', space=smem, size = 0x4, offset = 0x4, fixed_abs, tag = 'smem constant byte address 0x4 - core index']
  #allocation1 [shape = 'u32[72,128]{1,0:T(1,128)}', space=vmem, size = 0x9000, scoped, tag = 'internal scratch']
  %s0 = inlined_call_operand.vmem [shape: f32[2,4,256], index: 0, kind: input, shape index: {}]
  %s1 = inlined_call_operand.vmem [shape: f32[3,16,4], index: 1, kind: input, shape index: {}]
  %s2 = inlined_call_operand.vmem [shape: f32[16,1], index: 2, kind: input, shape index: {}]
  %s3 = inlined_call_operand.hbm [shape: f32[2,8,224], index: 3, kind: output, shape index: {}]
  %s4 = sld [smem:[#allocation0]]
  $region45: #{tpu_custom_call.1} parent=0
    _
  %s6 = ssub.s32 1, %s4
  %s7 = scalar_select 0, %s6, %s4
  $region1: #{tpu_custom_call.1} parent=0
    #allocation2 [shape = 'u8[16384]{0}', space=vmem, size = 0x4000, scoped, tag = 'output window, operand 0']
    #allocation3 [shape = 's32[2]{0}', space=sflag, size = 0x8, scoped, tag = 'scoped memory for tpu_custom_call.1']
    %8 = vsyncpa [#allocation3], 0
    %s9 = scalar_lea.sflag [#allocation3], 1
    %10 = vsyncpa %s9, 0
    loop: start=0, step=1, limit=4
    $region2: #{tpu_custom_call.1} parent=1 // loop_pre_header
      _
    $region3: #{tpu_custom_call.1} parent=1 // loop_header
      %s12 = sphi 0, %s16
      %p13 = scmp.ge.s32.totalorder %s12, 4
      %s22 = sphi 0, %s24
      %s25 = sphi 0, %s22
      %s26 = sphi 0, %s25
      %s42 = sphi 0, %s26
      %s46 = sphi 0, %s46
      %s48 = sphi 0, %s46
      %s49 = sphi 0, %s48
      %s63 = sphi 0, %s49
      %s67 = sphi 0, %s67
      %s69 = sphi 0, %s67
      %s70 = sphi 0, %s69
      %s84 = sphi 0, %s70
      %s90 = sphi 0, %s92
      %s93 = sphi 0, %s90
      %s94 = sphi 0, %s93
      %s110 = sphi 0, %s94
    $region4: #{tpu_custom_call.1} parent=1 // loop_header_branch
      %15 = sbr.rel (%p13) target = $region8
    $region5: #{tpu_custom_call.1} parent=1 // loop_body
      %s17 = ssub.s32 %s12, 1
      %s18 = ssub.s32 %s12, 2
      %s19 = sadd.s32 %s12, 1
      %s20 = ssub.s32 %s12, %s19
      %p21 = scmp.eq.s32.totalorder %s20, 0
      %s23 = sadd.s32 %s22, 1
      %s24 = scalar_select %p21, %s22, %s23
      %p27 = pneg %p21
      %p28 = scmp.eq.s32.totalorder %s12, 1
      %p29 = por %p27, %p28
      %p30 = scmp.ne.s32.totalorder %s22, %s25
      %p31 = scmp.eq.s32.totalorder %s12, 0
      %p32 = por %p30, %p31
      %p33 = scmp.ne.s32.totalorder %s22, %s25
      %p34 = scmp.eq.s32.totalorder %s17, 1
      %p35 = por %p33, %p34
      %p36 = scmp.ne.s32.totalorder %s25, %s26
      %p37 = scmp.eq.s32.totalorder %s17, 0
      %p38 = por %p36, %p37
      %p39 = scmp.ne.s32.totalorder %s25, %s26
      %p40 = scmp.eq.s32.totalorder %s18, 1
      %p41 = por %p39, %p40
      %p43 = scmp.ne.s32.totalorder %s26, %s42
      %p44 = scmp.eq.s32.totalorder %s18, 0
      %p45 = por %p43, %p44
      %s47 = sadd.s32 %s46, 1
      %p50 = scmp.eq.s32.totalorder %s12, 1
      %p51 = scmp.ne.s32.totalorder %s46, %s48
      %p52 = scmp.eq.s32.totalorder %s12, 0
      %p53 = por %p51, %p52
      %p54 = scmp.ne.s32.totalorder %s46, %s48
      %p55 = scmp.eq.s32.totalorder %s17, 1
      %p56 = por %p54, %p55
      %p57 = scmp.ne.s32.totalorder %s48, %s49
      %p58 = scmp.eq.s32.totalorder %s17, 0
      %p59 = por %p57, %p58
      %p60 = scmp.ne.s32.totalorder %s48, %s49
      %p61 = scmp.eq.s32.totalorder %s18, 1
      %p62 = por %p60, %p61
      %p64 = scmp.ne.s32.totalorder %s49, %s63
      %p65 = scmp.eq.s32.totalorder %s18, 0
      %p66 = por %p64, %p65
      %s68 = sadd.s32 %s67, 1
      %p71 = scmp.eq.s32.totalorder %s12, 1
      %p72 = scmp.ne.s32.totalorder %s67, %s69
      %p73 = scmp.eq.s32.totalorder %s12, 0
      %p74 = por %p72, %p73
      %p75 = scmp.ne.s32.totalorder %s67, %s69
      %p76 = scmp.eq.s32.totalorder %s17, 1
      %p77 = por %p75, %p76
      %p78 = scmp.ne.s32.totalorder %s69, %s70
      %p79 = scmp.eq.s32.totalorder %s17, 0
      %p80 = por %p78, %p79
      %p81 = scmp.ne.s32.totalorder %s69, %s70
      %p82 = scmp.eq.s32.totalorder %s18, 1
      %p83 = por %p81, %p82
      %p85 = scmp.ne.s32.totalorder %s70, %s84
      %p86 = scmp.eq.s32.totalorder %s18, 0
      %p87 = por %p85, %p86
      %s88 = ssub.s32 %s12, %s19
      %p89 = scmp.eq.s32.totalorder %s88, 0
      %s91 = sadd.s32 %s90, 1
      %s92 = scalar_select %p89, %s90, %s91
      %p95 = pneg %p89
      %p96 = scmp.eq.s32.totalorder %s12, 1
      %p97 = por %p95, %p96
      %p98 = scmp.ne.s32.totalorder %s90, %s93
      %p99 = scmp.eq.s32.totalorder %s12, 0
      %p100 = por %p98, %p99
      %p101 = scmp.ne.s32.totalorder %s90, %s93
      %p102 = scmp.eq.s32.totalorder %s17, 1
      %p103 = por %p101, %p102
      %p104 = scmp.ne.s32.totalorder %s93, %s94
      %p105 = scmp.eq.s32.totalorder %s17, 0
      %p106 = por %p104, %p105
      %p107 = scmp.ne.s32.totalorder %s93, %s94
      %p108 = scmp.eq.s32.totalorder %s18, 1
      %p109 = por %p107, %p108
      %p111 = scmp.ne.s32.totalorder %s94, %s110
      %p112 = scmp.eq.s32.totalorder %s18, 0
      %p113 = por %p111, %p112
      %p114 = scmp.le.s32.totalorder 1, %s12
      %p115 = scmp.lt.s32.totalorder %s12, 3
      %p116 = pnand %p114, %p115
      %p117 = pneg %p116
      // Predicated region
      $region9: #{tpu_custom_call.1} parent=5 // pred_check
        _
      $region10: #{tpu_custom_call.1} parent=5 // pred_check_branch
        %119 = sbr.rel (%p116) target = $region12
      $region11: #{tpu_custom_call.1} parent=5 // pred_region
        %s120 = ssub.s32 %s12, 1
        // Predicated region
        $region13: #{tpu_custom_call.1} parent=11 // pred_check
          %p121 = pneg %p59
        $region14: #{tpu_custom_call.1} parent=11 // pred_check_branch
          %123 = sbr.rel (%p121) target = $region16
        $region15: #{tpu_custom_call.1} parent=11 // pred_region
          _
        $region16: #{tpu_custom_call.1} parent=11 // pred_fallthru
          _
        // Predicated region
        $region17: #{tpu_custom_call.1} parent=11 // pred_check
          %p124 = pneg %p80
        $region18: #{tpu_custom_call.1} parent=11 // pred_check_branch
          %126 = sbr.rel (%p124) target = $region20
        $region19: #{tpu_custom_call.1} parent=11 // pred_region
          _
        $region20: #{tpu_custom_call.1} parent=11 // pred_fallthru
          _
      $region12: #{tpu_custom_call.1} parent=5 // pred_fallthru
        _
      %p127 = scmp.lt.s32.totalorder %s12, 2
      // Predicated region
      $region21: #{tpu_custom_call.1} parent=5 // pred_check
        %p128 = pneg %p127
      $region22: #{tpu_custom_call.1} parent=5 // pred_check_branch
        %130 = sbr.rel (%p128) target = $region24
      $region23: #{tpu_custom_call.1} parent=5 // pred_region
        // Predicated region
        $region25: #{tpu_custom_call.1} parent=23 // pred_check
          %p131 = pneg %p32
        $region26: #{tpu_custom_call.1} parent=23 // pred_check_branch
          %133 = sbr.rel (%p131) target = $region28
        $region27: #{tpu_custom_call.1} parent=23 // pred_region
          %p134 = scmp.lt.s32.totalorder %s12, 1
          %s135 = scalar_select %p134, %s12, 1
          %s136 = smul.addr %s135, 2
          %s137 = smul.addr %s136, 4
          %s138 = scalar_lea.vmem %s0, %s137
        $region28: #{tpu_custom_call.1} parent=23 // pred_fallthru
          _
      $region24: #{tpu_custom_call.1} parent=5 // pred_fallthru
        _
      %p139 = scmp.le.s32.totalorder 1, %s12
      %p140 = scmp.lt.s32.totalorder %s12, 3
      %p141 = pnand %p139, %p140
      %p142 = pneg %p141
      // Predicated region
      $region29: #{tpu_custom_call.1} parent=5 // pred_check
        _
      $region30: #{tpu_custom_call.1} parent=5 // pred_check_branch
        %144 = sbr.rel (%p141) target = $region32
      $region31: #{tpu_custom_call.1} parent=5 // pred_region
        %s145 = ssub.s32 %s12, 1
        %p146 = scmp.lt.s32.totalorder %s17, 1
        %s147 = scalar_select %p146, %s17, 1
        %s148 = smul.addr %s147, 2
        %s149 = smul.addr %s148, 4
        %s150 = scalar_lea.vmem %s0, %s149
        %p151 = pneg %p38
        %p152 = pneg %p35
        %p153 = pneg %p59
        %p154 = pneg %p56
        %p155 = pneg %p80
        %p156 = pneg %p77
        %p157 = pneg %p106
        %p158 = pneg %p103
        %s159 = sand.u32 %s93, 1
        %s160 = scalar_lea.sflag [#allocation3], %s159
        %s161 = sand.u32 %s93, 1
        %s162 = smul.addr %s161, 16
        %s163 = scalar_lea.vmem [#allocation2], %s162
        %p164 = scmp.lt.s32.totalorder %s17, 1
        %s165 = scalar_select %p164, %s17, 1
        %s166 = smul.addr %s165, 2
        %s167 = smul.addr %s166, 4
        %s168 = scalar_lea.vmem %s0, %s167
        %v169 = vld [vmem:[%s168] sm:$0xff]
        %v170 = vld [vmem:[%s1] sm:$0xff]
        %v171 = vld [vmem:[%s1 + $0x8] sm:$0xff]
        %s172 = scalar_lea.vmem %s1, 16
        %v173 = vld [vmem:[%s172] sm:$0xff]
        %v174 = vld [vmem:[%s172 + $0x8] sm:$0xff]
        %176 = vst [vmem:[#allocation1] ss:$2 sm:$0xff] %v169
        %v177 = vld.sshfl [vmem:[#allocation1] sm:$0xff pattern:$0x75316420]
        %v178 = vld.sshfl [vmem:[#allocation1 + $0x8] sm:$0xff pattern:$0x75316420]
        %179 = vrot.lane.b32.xlu0 %v177, 112
        %v180 = vpop.permute.xlu0 %179
        %181 = vrot.lane.b32.xlu0 %v178, 112
        %v182 = vpop.permute.xlu0 %181
        %vm183 = vcmask 916480
        %v184 = vsel %vm183, %v180, %v182
        %vm185 = vcmask 31744
        %v187 = vsel %vm185, %v173, 0
        %v190 = vsel %vm185, %v174, 0
        %vm192 = vcmask 1043456
        %v193 = vsel %vm192, %v184, 0
        %v195 = vsel %vm192, %v182, 0
        %197 = vmatpush.msra.mxu0 0.0
        %198 = vmatpush.msra.mxu0 0.0
        %199 = vmatpush.msra.mxu0 0.0
        %200 = vmatpush.msra.mxu0 0.0
        %201 = vmatpush.msra.mxu0 0.0
        %202 = vmatpush.msra.mxu0 0.0
        %203 = vmatpush.msra.mxu0 0.0
        %204 = vmatpush.msra.mxu0 0.0
        %205 = vmatpush.msra.mxu0 0.0
        %206 = vmatpush.msra.mxu0 0.0
        %207 = vmatpush.msra.mxu0 0.0
        %208 = vmatpush.msra.mxu0 0.0
        %209 = vmatpush.msra.mxu0 0.0
        %210 = vmatpush.msra.mxu0 0.0
        %211 = vmatpush.msra.mxu0 0.0
        %212 = vmatpush.msra.mxu0 %v193
        %213 = vmatmul.f32.gmra.mxu0 %v187
        %v214 = vpop.f32.mrf.mxu0
        %v215 = vadd.f32 0.0, %v214
        %216 = vmatmul.f32.gmra.mxu0 %v190
        %v217 = vpop.f32.mrf.mxu0
        %v218 = vadd.f32 0.0, %v217
        %219 = vdwg.mxu0
        %220 = vmatpush.msra.mxu0 0.0
        %221 = vmatpush.msra.mxu0 0.0
        %222 = vmatpush.msra.mxu0 0.0
        %223 = vmatpush.msra.mxu0 0.0
        %224 = vmatpush.msra.mxu0 0.0
        %225 = vmatpush.msra.mxu0 0.0
        %226 = vmatpush.msra.mxu0 0.0
        %227 = vmatpush.msra.mxu0 0.0
        %228 = vmatpush.msra.mxu0 0.0
        %229 = vmatpush.msra.mxu0 0.0
        %230 = vmatpush.msra.mxu0 0.0
        %231 = vmatpush.msra.mxu0 0.0
        %232 = vmatpush.msra.mxu0 0.0
        %233 = vmatpush.msra.mxu0 0.0
        %234 = vmatpush.msra.mxu0 0.0
        %235 = vmatpush.msra.mxu0 %v195
        %236 = vmatmul.f32.gmra.mxu0 %v187
        %v237 = vpop.f32.mrf.mxu0
        %v238 = vadd.f32 0.0, %v237
        %239 = vmatmul.f32.gmra.mxu0 %v190
        %v240 = vpop.f32.mrf.mxu0
        %v241 = vadd.f32 0.0, %v240
        %242 = vdwg.mxu0
        %243 = vst [vmem:[#allocation1] ss:$2 sm:$0xff] %v169
        %v244 = vld.sshfl [vmem:[#allocation1] sm:$0xff pattern:$0x75316420]
        %v245 = vld.sshfl [vmem:[#allocation1 + $0x8] sm:$0xff pattern:$0x75316420]
        %v247 = vsel %vm185, %v170, 0
        %v250 = vsel %vm185, %v171, 0
        %v252 = vsel %vm192, %v244, 0
        %v254 = vsel %vm192, %v245, 0
        %256 = vmatpush.msra.mxu0 0.0
        %257 = vmatpush.msra.mxu0 0.0
        %258 = vmatpush.msra.mxu0 0.0
        %259 = vmatpush.msra.mxu0 0.0
        %260 = vmatpush.msra.mxu0 0.0
        %261 = vmatpush.msra.mxu0 0.0
        %262 = vmatpush.msra.mxu0 0.0
        %263 = vmatpush.msra.mxu0 0.0
        %264 = vmatpush.msra.mxu0 0.0
        %265 = vmatpush.msra.mxu0 0.0
        %266 = vmatpush.msra.mxu0 0.0
        %267 = vmatpush.msra.mxu0 0.0
        %268 = vmatpush.msra.mxu0 0.0
        %269 = vmatpush.msra.mxu0 0.0
        %270 = vmatpush.msra.mxu0 0.0
        %271 = vmatpush.msra.mxu0 %v252
        %272 = vmatmul.f32.gmra.mxu0 %v247
        %v273 = vpop.f32.mrf.mxu0
        %v274 = vadd.f32 %v215, %v273
        %275 = vmatmul.f32.gmra.mxu0 %v250
        %v276 = vpop.f32.mrf.mxu0
        %v277 = vadd.f32 %v218, %v276
        %278 = vdwg.mxu0
        %279 = vmatpush.msra.mxu0 0.0
        %280 = vmatpush.msra.mxu0 0.0
        %281 = vmatpush.msra.mxu0 0.0
        %282 = vmatpush.msra.mxu0 0.0
        %283 = vmatpush.msra.mxu0 0.0
        %284 = vmatpush.msra.mxu0 0.0
        %285 = vmatpush.msra.mxu0 0.0
        %286 = vmatpush.msra.mxu0 0.0
        %287 = vmatpush.msra.mxu0 0.0
        %288 = vmatpush.msra.mxu0 0.0
        %289 = vmatpush.msra.mxu0 0.0
        %290 = vmatpush.msra.mxu0 0.0
        %291 = vmatpush.msra.mxu0 0.0
        %292 = vmatpush.msra.mxu0 0.0
        %293 = vmatpush.msra.mxu0 0.0
        %294 = vmatpush.msra.mxu0 %v254
        %295 = vmatmul.f32.gmra.mxu0 %v247
        %v296 = vpop.f32.mrf.mxu0
        %v297 = vadd.f32 %v238, %v296
        %298 = vmatmul.f32.gmra.mxu0 %v250
        %v299 = vpop.f32.mrf.mxu0
        %v300 = vadd.f32 %v241, %v299
        %301 = vdwg.mxu0
        %s302 = scalar_lea.vmem %s1, 32
        %v303 = vld [vmem:[%s302] sm:$0xff]
        %v304 = vld [vmem:[%s302 + $0x8] sm:$0xff]
        %305 = vst [vmem:[#allocation1] ss:$2 sm:$0xff] %v169
        %v306 = vld.sshfl [vmem:[#allocation1] sm:$0xff pattern:$0x75316420]
        %v307 = vld.sshfl [vmem:[#allocation1 + $0x8] sm:$0xff pattern:$0x75316420]
        %308 = vrot.lane.b32.xlu0 %v306, 96
        %v309 = vpop.permute.xlu0 %308
        %310 = vrot.lane.b32.xlu0 %v307, 96
        %v311 = vpop.permute.xlu0 %310
        %vm312 = vcmask 785408
        %v313 = vsel %vm312, %v309, %v311
        %v315 = vsel %vm185, %v303, 0
        %v318 = vsel %vm185, %v304, 0
        %v320 = vsel %vm192, %v313, 0
        %v322 = vsel %vm192, %v311, 0
        %324 = vmatpush.msra.mxu0 0.0
        %325 = vmatpush.msra.mxu0 0.0
        %326 = vmatpush.msra.mxu0 0.0
        %327 = vmatpush.msra.mxu0 0.0
        %328 = vmatpush.msra.mxu0 0.0
        %329 = vmatpush.msra.mxu0 0.0
        %330 = vmatpush.msra.mxu0 0.0
        %331 = vmatpush.msra.mxu0 0.0
        %332 = vmatpush.msra.mxu0 0.0
        %333 = vmatpush.msra.mxu0 0.0
        %334 = vmatpush.msra.mxu0 0.0
        %335 = vmatpush.msra.mxu0 0.0
        %336 = vmatpush.msra.mxu0 0.0
        %337 = vmatpush.msra.mxu0 0.0
        %338 = vmatpush.msra.mxu0 0.0
        %339 = vmatpush.msra.mxu0 %v320
        %340 = vmatmul.f32.gmra.mxu0 %v315
        %v341 = vpop.f32.mrf.mxu0
        %v342 = vadd.f32 0.0, %v341
        %343 = vmatmul.f32.gmra.mxu0 %v318
        %v344 = vpop.f32.mrf.mxu0
        %v345 = vadd.f32 0.0, %v344
        %346 = vdwg.mxu0
        %347 = vmatpush.msra.mxu0 0.0
        %348 = vmatpush.msra.mxu0 0.0
        %349 = vmatpush.msra.mxu0 0.0
        %350 = vmatpush.msra.mxu0 0.0
        %351 = vmatpush.msra.mxu0 0.0
        %352 = vmatpush.msra.mxu0 0.0
        %353 = vmatpush.msra.mxu0 0.0
        %354 = vmatpush.msra.mxu0 0.0
        %355 = vmatpush.msra.mxu0 0.0
        %356 = vmatpush.msra.mxu0 0.0
        %357 = vmatpush.msra.mxu0 0.0
        %358 = vmatpush.msra.mxu0 0.0
        %359 = vmatpush.msra.mxu0 0.0
        %360 = vmatpush.msra.mxu0 0.0
        %361 = vmatpush.msra.mxu0 0.0
        %362 = vmatpush.msra.mxu0 %v322
        %363 = vmatmul.f32.gmra.mxu0 %v315
        %v364 = vpop.f32.mrf.mxu0
        %v365 = vadd.f32 0.0, %v364
        %366 = vmatmul.f32.gmra.mxu0 %v318
        %v367 = vpop.f32.mrf.mxu0
        %v368 = vadd.f32 0.0, %v367
        %369 = vdwg.mxu0
        %v370 = vadd.f32 %v274, %v342
        %v371 = vadd.f32 %v297, %v365
        %v372 = vadd.f32 %v277, %v345
        %v373 = vadd.f32 %v300, %v368
        %v374 = vld [vmem:[%s2] sm:$0xff]
        %v375 = vld [vmem:[%s2 + $0x8] sm:$0xff]
        %377 = vset.pattern.permute.xlu0 0
        %378 = vperm.xlu0 %377, %v374
        %v379 = vpop.permute.xlu0 %378
        %382 = vset.pattern.permute.xlu0 0
        %383 = vperm.xlu0 %382, %v375
        %v384 = vpop.permute.xlu0 %383
        %v386 = vadd.f32 %v370, %v379
        %v387 = vadd.f32 %v371, %v379
        %v388 = vadd.f32 %v372, %v384
        %v389 = vadd.f32 %v373, %v384
        %390 = vst [vmem:[#allocation1] ss:$2 sm:$0xff] %v169
        %v391 = vld.sshfl [vmem:[#allocation1] sm:$0xff pattern:$0x75316420]
        %v392 = vld.sshfl [vmem:[#allocation1 + $0x8] sm:$0xff pattern:$0x75316420]
        %v395 = vsel %vm192, %v391, 0.0
        %v396 = vsel %vm192, %v392, 0.0
        %v397 = vxor.u32 %v388, 2147483648
        %v398 = vxor.u32 %v389, 2147483648
        %v399 = vmul.f32 %v397, 1.442695
        %v400 = vpow.pop %v399
        %v401 = vmul.f32 %v398, 1.442695
        %v402 = vpow.pop %v401
        %v403 = vadd.f32 %v400, 1.0
        %v404 = vadd.f32 %v402, 1.0
        %v405 = vrcp.pop %v403
        %v406 = vmul.f32 %v403, %v405
        %v407 = vsub.f32 1.0, %v406
        %v408 = vmul.f32 %v405, %v407
        %v409 = vadd.f32 %v405, %v408
        %vm410 = vweird.f32 %v403
        %vm411 = vweird.f32 %v405
        %vm412 = vmor %vm410, %vm411
        %v413 = vsel %vm412, %v405, %v409
        %v414 = vand.u32 2147483647, %v403
        %vm415 = vcmp.eq.f32.partialorder %v414, 8.507059e+37
        %v416 = vand.u32 %v403, 2147483648
        %v417 = vor.u32 1.1754944e-38, %v416
        %v418 = vsel %vm415, %v417, %v413
        %v419 = vmul.f32 1.0, %v418
        %v420 = vrcp.pop %v404
        %v421 = vmul.f32 %v404, %v420
        %v422 = vsub.f32 1.0, %v421
        %v423 = vmul.f32 %v420, %v422
        %v424 = vadd.f32 %v420, %v423
        %vm425 = vweird.f32 %v404
        %vm426 = vweird.f32 %v420
        %vm427 = vmor %vm425, %vm426
        %v428 = vsel %vm427, %v420, %v424
        %v429 = vand.u32 2147483647, %v404
        %vm430 = vcmp.eq.f32.partialorder %v429, 8.507059e+37
        %v431 = vand.u32 %v404, 2147483648
        %v432 = vor.u32 1.1754944e-38, %v431
        %v433 = vsel %vm430, %v432, %v428
        %v434 = vmul.f32 1.0, %v433
        %437 = vrot.lane.b32.xlu0 %v395, 96
        %v438 = vpop.permute.xlu0 %437
        %439 = vrot.lane.b32.xlu0 %v396, 96
        %v440 = vpop.permute.xlu0 %439
        %v441 = vsel %vm312, %v438, %v440
        %v444 = vadd.f32 %v386, %v441
        %v445 = vadd.f32 %v387, %v440
        %v446 = vmul.f32 %v444, %v419
        %v447 = vmul.f32 %v445, %v434
        %448 = vst [vmem:[%s163] sm:$0xff] %v446
        %449 = vst.msk [vmem:[%s163 + $0x8] sm:$0xff] %vm312, %v447
        %s450 = sand.u32 %s93, 1
        %s451 = scalar_lea.sflag [#allocation3], %s450
        %s452 = sand.u32 %s93, 1
        %s453 = smul.addr %s452, 16
        %s454 = scalar_lea.vmem [#allocation2], %s453
        // Predicated region
        $region33: #{tpu_custom_call.1} parent=31 // pred_check
          %p455 = pneg %p103
        $region34: #{tpu_custom_call.1} parent=31 // pred_check_branch
          %457 = sbr.rel (%p455) target = $region36
        $region35: #{tpu_custom_call.1} parent=31 // pred_region
          %459 = vsyncadd %s451, 0
          %s460 = smul.addr %s17, 2
          %s461 = smul.addr %s460, 8
          %s462 = scalar_lea.hbm %s3, %s461
          %s464 = sshll.u32 %s454, 4
          %s465 = int_to_ptr.vmem [resolvable:$true] %s464
          %s466 = sshll.u32 %s462, 4
          %s467 = int_to_ptr.hbm [resolvable:$true] %s466
          %469 = dma.vmem_to_hbm [thread:$0]  %s465, 256, %s467, %s451
        $region36: #{tpu_custom_call.1} parent=31 // pred_fallthru
          _
      $region32: #{tpu_custom_call.1} parent=5 // pred_fallthru
        _
      %p470 = scmp.le.s32.totalorder 2, %s12
      // Predicated region
      $region37: #{tpu_custom_call.1} parent=5 // pred_check
        %p471 = pneg %p470
      $region38: #{tpu_custom_call.1} parent=5 // pred_check_branch
        %473 = sbr.rel (%p471) target = $region40
      $region39: #{tpu_custom_call.1} parent=5 // pred_region
        %s474 = ssub.s32 %s12, 2
        // Predicated region
        $region41: #{tpu_custom_call.1} parent=39 // pred_check
          %p475 = pneg %p109
        $region42: #{tpu_custom_call.1} parent=39 // pred_check_branch
          %477 = sbr.rel (%p475) target = $region44
        $region43: #{tpu_custom_call.1} parent=39 // pred_region
          %s478 = sand.u32 %s94, 1
          %s479 = scalar_lea.sflag [#allocation3], %s478
          %s480 = sand.u32 %s94, 1
          %s481 = smul.addr %s480, 16
          %s482 = scalar_lea.vmem [#allocation2], %s481
          %484 = dma.done %s479, 256
        $region44: #{tpu_custom_call.1} parent=39 // pred_fallthru
          _
      $region40: #{tpu_custom_call.1} parent=5 // pred_fallthru
        _
    $region6: #{tpu_custom_call.1} parent=1 // loop_footer
      %s16 = sadd.s32 1, %s12
    $region7: #{tpu_custom_call.1} parent=1 // loop_footer_branch
      %11 = sbr.rel target = $region3
    $region8: #{tpu_custom_call.1} parent=1 // loop_exit
      _
    %485 = vsyncpa [#allocation3], 1
    %s486 = scalar_lea.sflag [#allocation3], 1
    %487 = vsyncpa %s486, 1

</llo_original>
